<compile_context>
chip_gen: v7x
topology: tpu7x:2x2x1
jax: 0.10.0
libtpu: 0.0.40
codegen_flags: <defaults>
</compile_context>

<pallas_src>
import jax
import jax.numpy as jnp
from jax.experimental import pallas as pl
from jax.experimental.pallas import tpu as pltpu


# ----------------------------- Pallas kernel --------------------------------
def simple_rnn_kernel(x_ref, h0_ref, wih_ref, whh_ref, b_ref, wfc_ref, bfc_ref,
                      out_ref, hn_ref, hs_ref):
    """Single-invocation RNN + FC (everything VMEM-resident).

    x_ref  : (B*T, I) bf16  batch-major rows (row = b*T + t), i.e. x.reshape(B*T, I)
    h0_ref : (B, H)   f32   initial hidden state
    wih_ref: (I, H)   bf16  W_ih^T
    whh_ref: (H, H)   bf16  W_hh^T
    b_ref  : (1, H)   f32   b_ih + b_hh
    wfc_ref: (H, O)   bf16  W_fc^T
    bfc_ref: (1, O)   f32   fc bias
    out_ref: (B*T, O) f32   fc over all hidden states, torch row order (b*T + t)
    hn_ref : (B, H)   f32   final hidden state
    hs_ref : (B, T, H) f32  VMEM scratch holding all hidden states
    """
    B, H = h0_ref.shape
    BT = x_ref.shape[0]
    T = BT // B

    # ---- Phase 1 (parallel): input projection for ALL timesteps as one GEMM. ----
    xw = jnp.dot(x_ref[...], wih_ref[...], preferred_element_type=jnp.float32)
    xw = xw + b_ref[...]                     # f32
    xw = xw.reshape(B, T, H)                 # row b*T + t  ->  [b, t, :]

    whh = whh_ref[...]                       # (H, H) bf16, reused every step

    # ---- Phase 2 (serial): only h @ W_hh sits on the recurrence critical path. ----
    h = h0_ref[...]                          # (B, H) f32, carried in registers
    for t in range(T):                       # T is small & static -> full unroll
        rec = jnp.dot(h.astype(jnp.bfloat16), whh,
                      preferred_element_type=jnp.float32)
        h = jnp.tanh(xw[:, t, :] + rec)      # add/tanh kept in f32 (v5e-safe)
        hs_ref[:, t, :] = h                  # off-critical-path store to VMEM scratch

    hn_ref[...] = h.astype(hn_ref.dtype)

    # ---- Phase 3 (parallel): FC over all hidden states as one GEMM. ----
    h_all = hs_ref[...].reshape(BT, H).astype(jnp.bfloat16)   # row = b*T + t
    y = jnp.dot(h_all, wfc_ref[...], preferred_element_type=jnp.float32)
    out_ref[...] = (y + bfc_ref[...]).astype(out_ref.dtype)


# ------------------------------ host wrapper ---------------------------------
@jax.jit
def simple_rnn_forward(x, hidden, params):
    """Mirrors SimpleRNN.forward: returns (out, hidden).

    x      : (B, T, I) f32  (batch_first, like torch)
    hidden : (1, B, H) f32
    out    : (B*T, O)  f32  (row order identical to torch's out.reshape(B*T, O))
    hidden : (1, B, H) f32  final hidden state
    """
    wih, whh, b, wfc, bfc = params
    B, T, I = x.shape
    H = wih.shape[1]
    O = wfc.shape[1]

    x_bt = x.reshape(B * T, I).astype(jnp.bfloat16)   # free flatten + bf16 MXU operand
    h0 = hidden[0]                                    # (B, H)
    wih_bf16 = wih.astype(jnp.bfloat16)
    whh_bf16 = whh.astype(jnp.bfloat16)
    wfc_bf16 = wfc.astype(jnp.bfloat16)

    vmem = lambda: pl.BlockSpec(memory_space=pltpu.MemorySpace.VMEM)
    out, h_n = pl.pallas_call(
        simple_rnn_kernel,
        out_shape=(
            jax.ShapeDtypeStruct((B * T, O), jnp.float32),
            jax.ShapeDtypeStruct((B, H), jnp.float32),
        ),
        in_specs=[vmem() for _ in range(7)],
        out_specs=(vmem(), vmem()),
        scratch_shapes=[pltpu.VMEM((B, T, H), jnp.float32)],
    )(x_bt, h0, wih_bf16, whh_bf16, b, wfc_bf16, bfc)

    return out, h_n[None]


# --------------------------- pure-JAX references ------------------------------
def ref_forward(x, hidden, params):
    """Exact f32 spec reference (matches the torch module semantics)."""
    wih, whh, b, wfc, bfc = params
    B, T, I = x.shape

    def step(h, x_t):
        h_new = jnp.tanh(x_t @ wih + h @ whh + b)
        return h_new, h_new

    h_last, hs = jax.lax.scan(step, hidden[0], jnp.transpose(x, (1, 0, 2)))
    out = jnp.transpose(hs, (1, 0, 2)).reshape(B * T, -1) @ wfc + bfc
    return out, h_last[None]


def ref_forward_bf16(x, hidden, params):
    """Reference matching the kernel's bf16-operand matmuls (f32 accumulation)."""
    wih, whh, b, wfc, bfc = params
    B, T, I = x.shape
    wih_bf = wih.astype(jnp.bfloat16)
    whh_bf = whh.astype(jnp.bfloat16)
    wfc_bf = wfc.astype(jnp.bfloat16)

    xw = jnp.dot(x.reshape(B * T, I).astype(jnp.bfloat16), wih_bf,
                 preferred_element_type=jnp.float32) + b
    xw = xw.reshape(B, T, -1)

    def step(h, xw_t):
        rec = jnp.dot(h.astype(jnp.bfloat16), whh_bf,
                      preferred_element_type=jnp.float32)
        h_new = jnp.tanh(xw_t + rec)
        return h_new, h_new

    h_last, hs = jax.lax.scan(step, hidden[0], jnp.transpose(xw, (1, 0, 2)))
    h_all = jnp.transpose(hs, (1, 0, 2)).reshape(B * T, -1).astype(jnp.bfloat16)
    out = jnp.dot(h_all, wfc_bf, preferred_element_type=jnp.float32) + bfc
    return out, h_last[None]


# --------------------------------- main --------------------------------------
if __name__ == "__main__":
    # Module constants: len(set(text)) == 17 unique chars, hidden_size = 128.
    text = 'hello world this is a simple text generation example '
    input_size = len(sorted(set(text)))     # 17
    hidden_size = 128
    output_size = input_size                # 17
    batch, seq = 2, 8

    key = jax.random.PRNGKey(0)
    k = jax.random.split(key, 8)
    bound = 1.0 / jnp.sqrt(hidden_size)

    # Parameters (deterministic, torch-style uniform init), stored transposed.
    wih = jax.random.uniform(k[0], (input_size, hidden_size), jnp.float32, -bound, bound)
    whh = jax.random.uniform(k[1], (hidden_size, hidden_size), jnp.float32, -bound, bound)
    b_ih = jax.random.uniform(k[2], (1, hidden_size), jnp.float32, -bound, bound)
    b_hh = jax.random.uniform(k[3], (1, hidden_size), jnp.float32, -bound, bound)
    b = b_ih + b_hh
    wfc = jax.random.uniform(k[4], (hidden_size, output_size), jnp.float32, -bound, bound)
    bfc = jax.random.uniform(k[5], (1, output_size), jnp.float32, -bound, bound)
    params = (wih, whh, b, wfc, bfc)

    # Inputs: dense float input (B, T, I) and zero init hidden (init_hidden).
    x = jax.random.normal(k[6], (batch, seq, input_size), jnp.float32)
    hidden = jnp.zeros((1, batch, hidden_size), jnp.float32)

    out, h_n = simple_rnn_forward(x, hidden, params)
    out = jax.block_until_ready(out)
    h_n = jax.block_until_ready(h_n)

    # Shape checks.
    assert out.shape == (batch * seq, output_size)
    assert h_n.shape == (1, batch, hidden_size)

    # Tight structural check against a bf16-matched reference (same math as kernel).
    out_bref, h_bref = ref_forward_bf16(x, hidden, params)
    assert jnp.allclose(out, out_bref, atol=2e-3, rtol=2e-3)
    assert jnp.allclose(h_n, h_bref, atol=2e-3, rtol=2e-3)

    # Semantic check against the exact f32 spec reference; tolerance covers the
    # bf16 matmul operands (f32 accumulation) over T=8 recurrent steps.
    out_ref, h_ref = ref_forward(x, hidden, params)
    assert jnp.allclose(out, out_ref, atol=5e-2, rtol=5e-2)
    assert jnp.allclose(h_n, h_ref, atol=5e-2, rtol=5e-2)

    print("KERNEL_OK")
</pallas_src>

<mosaic_0001>
module attributes {stable_mosaic.version = 11 : i64} {
  func.func @simple_rnn_kernel(%arg0: memref<16x17xbf16, #tpu.memory_space<vmem>>, %arg1: memref<2x128xf32, #tpu.memory_space<vmem>>, %arg2: memref<17x128xbf16, #tpu.memory_space<vmem>>, %arg3: memref<128x128xbf16, #tpu.memory_space<vmem>>, %arg4: memref<1x128xf32, #tpu.memory_space<vmem>>, %arg5: memref<128x17xbf16, #tpu.memory_space<vmem>>, %arg6: memref<1x17xf32, #tpu.memory_space<vmem>>, %arg7: memref<16x17xf32, #tpu.memory_space<vmem>>, %arg8: memref<2x128xf32, #tpu.memory_space<vmem>>, %arg9: memref<2x8x128xf32, #tpu.memory_space<vmem>>) attributes {dimension_semantics = [], scalar_prefetch = 0 : i64, scratch_operands = 1 : i64, tpu.core_type = #tpu.core_type<tc>} {
    %c0 = arith.constant 0 : index
    %c0_0 = arith.constant 0 : index
    %0 = vector.load %arg0[%c0, %c0_0] : memref<16x17xbf16, #tpu.memory_space<vmem>>, vector<16x17xbf16>
    %c0_1 = arith.constant 0 : index
    %c0_2 = arith.constant 0 : index
    %1 = vector.load %arg2[%c0_1, %c0_2] : memref<17x128xbf16, #tpu.memory_space<vmem>>, vector<17x128xbf16>
    %cst = arith.constant dense<0.000000e+00> : vector<16x128xf32>
    %2 = tpu.matmul %0, %1, %cst {dimension_numbers = #tpu.dot_dimension_numbers<[1], [0], [0], [1], [0, 0, 1, 1], [], []>} : vector<16x17xbf16>, vector<17x128xbf16>, vector<16x128xf32> -> vector<16x128xf32>
    %c0_3 = arith.constant 0 : index
    %c0_4 = arith.constant 0 : index
    %3 = vector.load %arg4[%c0_3, %c0_4] : memref<1x128xf32, #tpu.memory_space<vmem>>, vector<1x128xf32>
    %4 = vector.broadcast %3 : vector<1x128xf32> to vector<16x128xf32>
    %5 = arith.addf %2, %4 : vector<16x128xf32>
    %6 = vector.shape_cast %5 : vector<16x128xf32> to vector<2x8x128xf32>
    %c0_5 = arith.constant 0 : index
    %c0_6 = arith.constant 0 : index
    %7 = vector.load %arg3[%c0_5, %c0_6] : memref<128x128xbf16, #tpu.memory_space<vmem>>, vector<128x128xbf16>
    %c0_7 = arith.constant 0 : index
    %c0_8 = arith.constant 0 : index
    %8 = vector.load %arg1[%c0_7, %c0_8] : memref<2x128xf32, #tpu.memory_space<vmem>>, vector<2x128xf32>
    %9 = arith.truncf %8 : vector<2x128xf32> to vector<2x128xbf16>
    %cst_9 = arith.constant dense<0.000000e+00> : vector<2x128xf32>
    %10 = tpu.matmul %9, %7, %cst_9 {dimension_numbers = #tpu.dot_dimension_numbers<[1], [0], [0], [1], [0, 0, 1, 1], [], []>} : vector<2x128xbf16>, vector<128x128xbf16>, vector<2x128xf32> -> vector<2x128xf32>
    %11 = vector.extract_strided_slice %6 {offsets = [0, 0, 0], sizes = [2, 1, 128], strides = [1, 1, 1]} : vector<2x8x128xf32> to vector<2x1x128xf32>
    %12 = vector.shape_cast %11 : vector<2x1x128xf32> to vector<2x128xf32>
    %13 = arith.addf %12, %10 : vector<2x128xf32>
    %14 = math.tanh %13 : vector<2x128xf32>
    %c0_10 = arith.constant 0 : index
    %c0_11 = arith.constant 0 : index
    %c0_12 = arith.constant 0 : index
    %15 = vector.load %arg9[%c0_10, %c0_11, %c0_12] : memref<2x8x128xf32, #tpu.memory_space<vmem>>, vector<2x1x128xf32>
    %16 = vector.shape_cast %15 : vector<2x1x128xf32> to vector<2x128xf32>
    %17 = vector.shape_cast %14 : vector<2x128xf32> to vector<2x1x128xf32>
    tpu.vector_store %arg9[%c0_10, %c0_11, %c0_12], %17 {strides = array<i32>} : memref<2x8x128xf32, #tpu.memory_space<vmem>>, vector<2x1x128xf32>,
    %18 = arith.truncf %14 : vector<2x128xf32> to vector<2x128xbf16>
    %cst_13 = arith.constant dense<0.000000e+00> : vector<2x128xf32>
    %19 = tpu.matmul %18, %7, %cst_13 {dimension_numbers = #tpu.dot_dimension_numbers<[1], [0], [0], [1], [0, 0, 1, 1], [], []>} : vector<2x128xbf16>, vector<128x128xbf16>, vector<2x128xf32> -> vector<2x128xf32>
    %20 = vector.extract_strided_slice %6 {offsets = [0, 1, 0], sizes = [2, 1, 128], strides = [1, 1, 1]} : vector<2x8x128xf32> to vector<2x1x128xf32>
    %21 = vector.shape_cast %20 : vector<2x1x128xf32> to vector<2x128xf32>
    %22 = arith.addf %21, %19 : vector<2x128xf32>
    %23 = math.tanh %22 : vector<2x128xf32>
    %c0_14 = arith.constant 0 : index
    %c1 = arith.constant 1 : index
    %c0_15 = arith.constant 0 : index
    %24 = vector.load %arg9[%c0_14, %c1, %c0_15] : memref<2x8x128xf32, #tpu.memory_space<vmem>>, vector<2x1x128xf32>
    %25 = vector.shape_cast %24 : vector<2x1x128xf32> to vector<2x128xf32>
    %26 = vector.shape_cast %23 : vector<2x128xf32> to vector<2x1x128xf32>
    tpu.vector_store %arg9[%c0_14, %c1, %c0_15], %26 {strides = array<i32>} : memref<2x8x128xf32, #tpu.memory_space<vmem>>, vector<2x1x128xf32>,
    %27 = arith.truncf %23 : vector<2x128xf32> to vector<2x128xbf16>
    %cst_16 = arith.constant dense<0.000000e+00> : vector<2x128xf32>
    %28 = tpu.matmul %27, %7, %cst_16 {dimension_numbers = #tpu.dot_dimension_numbers<[1], [0], [0], [1], [0, 0, 1, 1], [], []>} : vector<2x128xbf16>, vector<128x128xbf16>, vector<2x128xf32> -> vector<2x128xf32>
    %29 = vector.extract_strided_slice %6 {offsets = [0, 2, 0], sizes = [2, 1, 128], strides = [1, 1, 1]} : vector<2x8x128xf32> to vector<2x1x128xf32>
    %30 = vector.shape_cast %29 : vector<2x1x128xf32> to vector<2x128xf32>
    %31 = arith.addf %30, %28 : vector<2x128xf32>
    %32 = math.tanh %31 : vector<2x128xf32>
    %c0_17 = arith.constant 0 : index
    %c2 = arith.constant 2 : index
    %c0_18 = arith.constant 0 : index
    %33 = vector.load %arg9[%c0_17, %c2, %c0_18] : memref<2x8x128xf32, #tpu.memory_space<vmem>>, vector<2x1x128xf32>
    %34 = vector.shape_cast %33 : vector<2x1x128xf32> to vector<2x128xf32>
    %35 = vector.shape_cast %32 : vector<2x128xf32> to vector<2x1x128xf32>
    tpu.vector_store %arg9[%c0_17, %c2, %c0_18], %35 {strides = array<i32>} : memref<2x8x128xf32, #tpu.memory_space<vmem>>, vector<2x1x128xf32>,
    %36 = arith.truncf %32 : vector<2x128xf32> to vector<2x128xbf16>
    %cst_19 = arith.constant dense<0.000000e+00> : vector<2x128xf32>
    %37 = tpu.matmul %36, %7, %cst_19 {dimension_numbers = #tpu.dot_dimension_numbers<[1], [0], [0], [1], [0, 0, 1, 1], [], []>} : vector<2x128xbf16>, vector<128x128xbf16>, vector<2x128xf32> -> vector<2x128xf32>
    %38 = vector.extract_strided_slice %6 {offsets = [0, 3, 0], sizes = [2, 1, 128], strides = [1, 1, 1]} : vector<2x8x128xf32> to vector<2x1x128xf32>
    %39 = vector.shape_cast %38 : vector<2x1x128xf32> to vector<2x128xf32>
    %40 = arith.addf %39, %37 : vector<2x128xf32>
    %41 = math.tanh %40 : vector<2x128xf32>
    %c0_20 = arith.constant 0 : index
    %c3 = arith.constant 3 : index
    %c0_21 = arith.constant 0 : index
    %42 = vector.load %arg9[%c0_20, %c3, %c0_21] : memref<2x8x128xf32, #tpu.memory_space<vmem>>, vector<2x1x128xf32>
    %43 = vector.shape_cast %42 : vector<2x1x128xf32> to vector<2x128xf32>
    %44 = vector.shape_cast %41 : vector<2x128xf32> to vector<2x1x128xf32>
    tpu.vector_store %arg9[%c0_20, %c3, %c0_21], %44 {strides = array<i32>} : memref<2x8x128xf32, #tpu.memory_space<vmem>>, vector<2x1x128xf32>,
    %45 = arith.truncf %41 : vector<2x128xf32> to vector<2x128xbf16>
    %cst_22 = arith.constant dense<0.000000e+00> : vector<2x128xf32>
    %46 = tpu.matmul %45, %7, %cst_22 {dimension_numbers = #tpu.dot_dimension_numbers<[1], [0], [0], [1], [0, 0, 1, 1], [], []>} : vector<2x128xbf16>, vector<128x128xbf16>, vector<2x128xf32> -> vector<2x128xf32>
    %47 = vector.extract_strided_slice %6 {offsets = [0, 4, 0], sizes = [2, 1, 128], strides = [1, 1, 1]} : vector<2x8x128xf32> to vector<2x1x128xf32>
    %48 = vector.shape_cast %47 : vector<2x1x128xf32> to vector<2x128xf32>
    %49 = arith.addf %48, %46 : vector<2x128xf32>
    %50 = math.tanh %49 : vector<2x128xf32>
    %c0_23 = arith.constant 0 : index
    %c4 = arith.constant 4 : index
    %c0_24 = arith.constant 0 : index
    %51 = vector.load %arg9[%c0_23, %c4, %c0_24] : memref<2x8x128xf32, #tpu.memory_space<vmem>>, vector<2x1x128xf32>
    %52 = vector.shape_cast %51 : vector<2x1x128xf32> to vector<2x128xf32>
    %53 = vector.shape_cast %50 : vector<2x128xf32> to vector<2x1x128xf32>
    tpu.vector_store %arg9[%c0_23, %c4, %c0_24], %53 {strides = array<i32>} : memref<2x8x128xf32, #tpu.memory_space<vmem>>, vector<2x1x128xf32>,
    %54 = arith.truncf %50 : vector<2x128xf32> to vector<2x128xbf16>
    %cst_25 = arith.constant dense<0.000000e+00> : vector<2x128xf32>
    %55 = tpu.matmul %54, %7, %cst_25 {dimension_numbers = #tpu.dot_dimension_numbers<[1], [0], [0], [1], [0, 0, 1, 1], [], []>} : vector<2x128xbf16>, vector<128x128xbf16>, vector<2x128xf32> -> vector<2x128xf32>
    %56 = vector.extract_strided_slice %6 {offsets = [0, 5, 0], sizes = [2, 1, 128], strides = [1, 1, 1]} : vector<2x8x128xf32> to vector<2x1x128xf32>
    %57 = vector.shape_cast %56 : vector<2x1x128xf32> to vector<2x128xf32>
    %58 = arith.addf %57, %55 : vector<2x128xf32>
    %59 = math.tanh %58 : vector<2x128xf32>
    %c0_26 = arith.constant 0 : index
    %c5 = arith.constant 5 : index
    %c0_27 = arith.constant 0 : index
    %60 = vector.load %arg9[%c0_26, %c5, %c0_27] : memref<2x8x128xf32, #tpu.memory_space<vmem>>, vector<2x1x128xf32>
    %61 = vector.shape_cast %60 : vector<2x1x128xf32> to vector<2x128xf32>
    %62 = vector.shape_cast %59 : vector<2x128xf32> to vector<2x1x128xf32>
    tpu.vector_store %arg9[%c0_26, %c5, %c0_27], %62 {strides = array<i32>} : memref<2x8x128xf32, #tpu.memory_space<vmem>>, vector<2x1x128xf32>,
    %63 = arith.truncf %59 : vector<2x128xf32> to vector<2x128xbf16>
    %cst_28 = arith.constant dense<0.000000e+00> : vector<2x128xf32>
    %64 = tpu.matmul %63, %7, %cst_28 {dimension_numbers = #tpu.dot_dimension_numbers<[1], [0], [0], [1], [0, 0, 1, 1], [], []>} : vector<2x128xbf16>, vector<128x128xbf16>, vector<2x128xf32> -> vector<2x128xf32>
    %65 = vector.extract_strided_slice %6 {offsets = [0, 6, 0], sizes = [2, 1, 128], strides = [1, 1, 1]} : vector<2x8x128xf32> to vector<2x1x128xf32>
    %66 = vector.shape_cast %65 : vector<2x1x128xf32> to vector<2x128xf32>
    %67 = arith.addf %66, %64 : vector<2x128xf32>
    %68 = math.tanh %67 : vector<2x128xf32>
    %c0_29 = arith.constant 0 : index
    %c6 = arith.constant 6 : index
    %c0_30 = arith.constant 0 : index
    %69 = vector.load %arg9[%c0_29, %c6, %c0_30] : memref<2x8x128xf32, #tpu.memory_space<vmem>>, vector<2x1x128xf32>
    %70 = vector.shape_cast %69 : vector<2x1x128xf32> to vector<2x128xf32>
    %71 = vector.shape_cast %68 : vector<2x128xf32> to vector<2x1x128xf32>
    tpu.vector_store %arg9[%c0_29, %c6, %c0_30], %71 {strides = array<i32>} : memref<2x8x128xf32, #tpu.memory_space<vmem>>, vector<2x1x128xf32>,
    %72 = arith.truncf %68 : vector<2x128xf32> to vector<2x128xbf16>
    %cst_31 = arith.constant dense<0.000000e+00> : vector<2x128xf32>
    %73 = tpu.matmul %72, %7, %cst_31 {dimension_numbers = #tpu.dot_dimension_numbers<[1], [0], [0], [1], [0, 0, 1, 1], [], []>} : vector<2x128xbf16>, vector<128x128xbf16>, vector<2x128xf32> -> vector<2x128xf32>
    %74 = vector.extract_strided_slice %6 {offsets = [0, 7, 0], sizes = [2, 1, 128], strides = [1, 1, 1]} : vector<2x8x128xf32> to vector<2x1x128xf32>
    %75 = vector.shape_cast %74 : vector<2x1x128xf32> to vector<2x128xf32>
    %76 = arith.addf %75, %73 : vector<2x128xf32>
    %77 = math.tanh %76 : vector<2x128xf32>
    %c0_32 = arith.constant 0 : index
    %c7 = arith.constant 7 : index
    %c0_33 = arith.constant 0 : index
    %78 = vector.load %arg9[%c0_32, %c7, %c0_33] : memref<2x8x128xf32, #tpu.memory_space<vmem>>, vector<2x1x128xf32>
    %79 = vector.shape_cast %78 : vector<2x1x128xf32> to vector<2x128xf32>
    %80 = vector.shape_cast %77 : vector<2x128xf32> to vector<2x1x128xf32>
    tpu.vector_store %arg9[%c0_32, %c7, %c0_33], %80 {strides = array<i32>} : memref<2x8x128xf32, #tpu.memory_space<vmem>>, vector<2x1x128xf32>,
    %c0_34 = arith.constant 0 : index
    %c0_35 = arith.constant 0 : index
    %81 = vector.load %arg8[%c0_34, %c0_35] : memref<2x128xf32, #tpu.memory_space<vmem>>, vector<2x128xf32>
    tpu.vector_store %arg8[%c0_34, %c0_35], %77 {strides = array<i32>} : memref<2x128xf32, #tpu.memory_space<vmem>>, vector<2x128xf32>,
    %c0_36 = arith.constant 0 : index
    %c0_37 = arith.constant 0 : index
    %c0_38 = arith.constant 0 : index
    %82 = vector.load %arg9[%c0_36, %c0_37, %c0_38] : memref<2x8x128xf32, #tpu.memory_space<vmem>>, vector<2x8x128xf32>
    %83 = vector.shape_cast %82 : vector<2x8x128xf32> to vector<16x128xf32>
    %84 = arith.truncf %83 : vector<16x128xf32> to vector<16x128xbf16>
    %c0_39 = arith.constant 0 : index
    %c0_40 = arith.constant 0 : index
    %85 = vector.load %arg5[%c0_39, %c0_40] : memref<128x17xbf16, #tpu.memory_space<vmem>>, vector<128x17xbf16>
    %cst_41 = arith.constant dense<0.000000e+00> : vector<16x17xf32>
    %86 = tpu.matmul %84, %85, %cst_41 {dimension_numbers = #tpu.dot_dimension_numbers<[1], [0], [0], [1], [0, 0, 1, 1], [], []>} : vector<16x128xbf16>, vector<128x17xbf16>, vector<16x17xf32> -> vector<16x17xf32>
    %c0_42 = arith.constant 0 : index
    %c0_43 = arith.constant 0 : index
    %87 = vector.load %arg6[%c0_42, %c0_43] : memref<1x17xf32, #tpu.memory_space<vmem>>, vector<1x17xf32>
    %88 = vector.broadcast %87 : vector<1x17xf32> to vector<16x17xf32>
    %89 = arith.addf %86, %88 : vector<16x17xf32>
    %c0_44 = arith.constant 0 : index
    %c0_45 = arith.constant 0 : index
    %90 = vector.load %arg7[%c0_44, %c0_45] : memref<16x17xf32, #tpu.memory_space<vmem>>, vector<16x17xf32>
    tpu.vector_store %arg7[%c0_44, %c0_45], %89 {strides = array<i32>} : memref<16x17xf32, #tpu.memory_space<vmem>>, vector<16x17xf32>,
    return
  }
}

</mosaic_0001>

<llo_original>
// kernel: simple_rnn_forward.1
$region0: #{simple_rnn_forward.1}
  #allocation0 [shape = 'u32[]', space=smem, size = 0x4, offset = 0x4, fixed_abs, tag = 'smem constant byte address 0x4 - core index']
  #allocation1 [shape = 'u32[144,128]{1,0:T(1,128)}', space=vmem, size = 0x12000, scoped, tag = 'internal scratch']
  #allocation2 [shape = 'f32[2,8,128]{2,1,0:T(8,128)}', space=vmem, size = 0x2000, scoped, tag = 'scratch operand']
  %s0 = inlined_call_operand.vmem [shape: bf16[16,17], index: 0, kind: input, shape index: {}]
  %s1 = inlined_call_operand.vmem [shape: f32[2,128], index: 1, kind: input, shape index: {}]
  %s2 = inlined_call_operand.vmem [shape: bf16[17,128], index: 2, kind: input, shape index: {}]
  %s3 = inlined_call_operand.vmem [shape: bf16[128,128], index: 3, kind: input, shape index: {}]
  %s4 = inlined_call_operand.vmem [shape: f32[1,128], index: 4, kind: input, shape index: {}]
  %s5 = inlined_call_operand.vmem [shape: bf16[128,17], index: 5, kind: input, shape index: {}]
  %s6 = inlined_call_operand.vmem [shape: f32[1,17], index: 6, kind: input, shape index: {}]
  %s7 = inlined_call_operand.hbm [shape: f32[16,17], index: 7, kind: output, shape index: {0}]
  %s8 = inlined_call_operand.hbm [shape: f32[2,128], index: 8, kind: output, shape index: {1}]
  %9 = xla_tuple %s7, %s8
  %s10 = sld [smem:[#allocation0]]
  $region46: #{simple_rnn_forward.1} parent=0
    _
  %s12 = ssub.s32 1, %s10
  %s13 = scalar_select 0, %s12, %s10
  $region1: #{simple_rnn_forward.1} parent=0
    #allocation3 [shape = 'u8[8192]{0}', space=vmem, size = 0x2000, scoped, tag = 'output window, operand 0, single buffered']
    #allocation4 [shape = 's32[1]{0}', space=sflag, size = 0x4, scoped, tag = 'scoped memory for simple_rnn_forward.1']
    #allocation5 [shape = 'u8[1024]{0}', space=vmem, size = 0x400, scoped, tag = 'output window, operand 1, single buffered']
    #allocation6 [shape = 's32[1]{0}', space=sflag, size = 0x4, scoped, tag = 'scoped memory for simple_rnn_forward.1']
    %14 = vsyncpa [#allocation4], 0
    %15 = vsyncpa [#allocation6], 0
    // Predicated region
    $region2: #{simple_rnn_forward.1} parent=1 // pred_check
      _
    $region3: #{simple_rnn_forward.1} parent=1 // pred_check_branch
      %17 = sbr.rel (0) target = $region5
    $region4: #{simple_rnn_forward.1} parent=1 // pred_region
      _
    $region5: #{simple_rnn_forward.1} parent=1 // pred_fallthru
      _
    // Predicated region
    $region6: #{simple_rnn_forward.1} parent=1 // pred_check
      _
    $region7: #{simple_rnn_forward.1} parent=1 // pred_check_branch
      %19 = sbr.rel (0) target = $region9
    $region8: #{simple_rnn_forward.1} parent=1 // pred_region
      _
    $region9: #{simple_rnn_forward.1} parent=1 // pred_fallthru
      _
    // Predicated region
    $region10: #{simple_rnn_forward.1} parent=1 // pred_check
      _
    $region11: #{simple_rnn_forward.1} parent=1 // pred_check_branch
      %21 = sbr.rel (0) target = $region13
    $region12: #{simple_rnn_forward.1} parent=1 // pred_region
      _
    $region13: #{simple_rnn_forward.1} parent=1 // pred_fallthru
      _
    // Predicated region
    $region14: #{simple_rnn_forward.1} parent=1 // pred_check
      _
    $region15: #{simple_rnn_forward.1} parent=1 // pred_check_branch
      %23 = sbr.rel (0) target = $region17
    $region16: #{simple_rnn_forward.1} parent=1 // pred_region
      _
    $region17: #{simple_rnn_forward.1} parent=1 // pred_fallthru
      _
    // Predicated region
    $region18: #{simple_rnn_forward.1} parent=1 // pred_check
      _
    $region19: #{simple_rnn_forward.1} parent=1 // pred_check_branch
      %25 = sbr.rel (0) target = $region21
    $region20: #{simple_rnn_forward.1} parent=1 // pred_region
      _
    $region21: #{simple_rnn_forward.1} parent=1 // pred_fallthru
      _
    // Predicated region
    $region22: #{simple_rnn_forward.1} parent=1 // pred_check
      _
    $region23: #{simple_rnn_forward.1} parent=1 // pred_check_branch
      %27 = sbr.rel (0) target = $region25
    $region24: #{simple_rnn_forward.1} parent=1 // pred_region
      _
    $region25: #{simple_rnn_forward.1} parent=1 // pred_fallthru
      _
    // Predicated region
    $region26: #{simple_rnn_forward.1} parent=1 // pred_check
      _
    $region27: #{simple_rnn_forward.1} parent=1 // pred_check_branch
      %29 = sbr.rel (0) target = $region29
    $region28: #{simple_rnn_forward.1} parent=1 // pred_region
      _
    $region29: #{simple_rnn_forward.1} parent=1 // pred_fallthru
      _
    %v31 = vld [vmem:[%s0] sm:$0xf]
    %v32 = vld [vmem:[%s0 + $0x4] sm:$0xf]
    %v33 = vld [vmem:[%s2] sm:$0xf]
    %v34 = vld [vmem:[%s2 + $0x4] sm:$0xf]
    %v35 = vld [vmem:[%s2 + $0x8] sm:$0x1]
    %v36 = vld [vmem:[%s4] sm:$0x1]
    %v38 = vlaneseq
    %v39 = vshrl.u32 %v38, 7
    %v40 = vsub.s32 0, %v39
    %v41 = vrot.slane %v36, %v40
    %v45 = vunpack.c.l.b16 %v31
    %v46 = vunpack.c.l.b16 %v32
    %v47 = vpack.c.b16 %v46, %v45
    %v51 = vunpack.c.l.b16 %v33
    %v52 = vunpack.c.l.b16 %v34
    %v53 = vunpack.c.l.b16 %v35
    %v54 = vpack.c.b16 %v52, %v51
    %v55 = vpack.c.b16 %v53, %v53
    %vm57 = vcmask 138240
    %v59 = vsel %vm57, %v47, 0
    %vm61 = vcmask 1040384
    %v62 = vsel 0, 4294967295, 65535
    %v63 = vsel %vm61, %v62, 0
    %v65 = vand.u32 %v55, %v63
    %67 = vmatprep.subr.bf16.mxu0 0
    %68 = vmatpush1.bf16.msra.mxu0 %v54
    %69 = vmatprep.subr.bf16.mxu0 0
    %70 = vmatpush1.bf16.msra.mxu0 %v65
    %71 = vmatprep.subr.bf16.mxu0 0
    %72 = vmatpush1.bf16.msra.mxu0 0
    %73 = vmatprep.subr.bf16.mxu0 0
    %74 = vmatpush1.bf16.msra.mxu0 0
    %75 = vmatprep.subr.bf16.mxu0 0
    %76 = vmatpush1.bf16.msra.mxu0 0
    %77 = vmatprep.subr.bf16.mxu0 0
    %78 = vmatpush1.bf16.msra.mxu0 0
    %79 = vmatprep.subr.bf16.mxu0 0
    %80 = vmatpush1.bf16.msra.mxu0 0
    %81 = vmatprep.subr.bf16.mxu0 0
    %82 = vmatpush1.bf16.msra.mxu0 0
    %83 = vmatprep.subr.bf16.mxu0 0
    %84 = vmatpush1.bf16.msra.mxu0 0
    %85 = vmatprep.subr.bf16.mxu0 0
    %86 = vmatpush1.bf16.msra.mxu0 0
    %87 = vmatprep.subr.bf16.mxu0 0
    %88 = vmatpush1.bf16.msra.mxu0 0
    %89 = vmatprep.subr.bf16.mxu0 0
    %90 = vmatpush1.bf16.msra.mxu0 0
    %91 = vmatprep.subr.bf16.mxu0 0
    %92 = vmatpush1.bf16.msra.mxu0 0
    %93 = vmatprep.subr.bf16.mxu0 0
    %94 = vmatpush1.bf16.msra.mxu0 0
    %95 = vmatprep.subr.bf16.mxu0 0
    %96 = vmatpush1.bf16.msra.mxu0 0
    %97 = vmatprep.subr.bf16.mxu0 0
    %98 = vmatpush1.bf16.msra.mxu0 0
    %99 = vmatprep.mubr.bf16.mxu0 0
    %100 = vmatmul.mubr.bf16.gmra.mrb[0].mxu0 %v59
    %v101 = vpop.f32.mrb[0].mxu0
    %v102 = vadd.f32 %v41, %v101
    %v103 = vpop.f32.mrb[0].mxu0
    %v104 = vpop.f32.mrb[0].mxu0
    %v105 = vadd.f32 %v41, %v104
    %v106 = vpop.f32.mrb[0].mxu0
    %107 = vdwg.mxu0
    %v108 = vld [vmem:[%s3] sm:$0xf]
    %v109 = vld [vmem:[%s3 + $0x4] sm:$0xf]
    %v110 = vld [vmem:[%s3 + $0x8] sm:$0xf]
    %v111 = vld [vmem:[%s3 + $0xc] sm:$0xf]
    %v112 = vld [vmem:[%s3 + $0x10] sm:$0xf]
    %v113 = vld [vmem:[%s3 + $0x14] sm:$0xf]
    %v114 = vld [vmem:[%s3 + $0x18] sm:$0xf]
    %v115 = vld [vmem:[%s3 + $0x1c] sm:$0xf]
    %v116 = vld [vmem:[%s3 + $0x20] sm:$0xf]
    %v117 = vld [vmem:[%s3 + $0x24] sm:$0xf]
    %v118 = vld [vmem:[%s3 + $0x28] sm:$0xf]
    %v119 = vld [vmem:[%s3 + $0x2c] sm:$0xf]
    %v120 = vld [vmem:[%s3 + $0x30] sm:$0xf]
    %v121 = vld [vmem:[%s3 + $0x34] sm:$0xf]
    %v122 = vld [vmem:[%s3 + $0x38] sm:$0xf]
    %v123 = vld [vmem:[%s3 + $0x3c] sm:$0xf]
    %v124 = vld [vmem:[%s1] sm:$0x3]
    %v125 = vpack.c.bf16 %v124, %v124
    %v142 = vunpack.c.l.b16 %v108
    %v143 = vunpack.c.l.b16 %v109
    %v144 = vunpack.c.l.b16 %v110
    %v145 = vunpack.c.l.b16 %v111
    %v146 = vunpack.c.l.b16 %v112
    %v147 = vunpack.c.l.b16 %v113
    %v148 = vunpack.c.l.b16 %v114
    %v149 = vunpack.c.l.b16 %v115
    %v150 = vunpack.c.l.b16 %v116
    %v151 = vunpack.c.l.b16 %v117
    %v152 = vunpack.c.l.b16 %v118
    %v153 = vunpack.c.l.b16 %v119
    %v154 = vunpack.c.l.b16 %v120
    %v155 = vunpack.c.l.b16 %v121
    %v156 = vunpack.c.l.b16 %v122
    %v157 = vunpack.c.l.b16 %v123
    %v158 = vpack.c.b16 %v143, %v142
    %v159 = vpack.c.b16 %v145, %v144
    %v160 = vpack.c.b16 %v147, %v146
    %v161 = vpack.c.b16 %v149, %v148
    %v162 = vpack.c.b16 %v151, %v150
    %v163 = vpack.c.b16 %v153, %v152
    %v164 = vpack.c.b16 %v155, %v154
    %v165 = vpack.c.b16 %v157, %v156
    %174 = vmatprep.subr.bf16.mxu0 0
    %175 = vmatpush1.bf16.msra.mxu0 %v158
    %176 = vmatprep.subr.bf16.mxu0 0
    %177 = vmatpush1.bf16.msra.mxu0 %v159
    %178 = vmatprep.subr.bf16.mxu0 0
    %179 = vmatpush1.bf16.msra.mxu0 %v160
    %180 = vmatprep.subr.bf16.mxu0 0
    %181 = vmatpush1.bf16.msra.mxu0 %v161
    %182 = vmatprep.subr.bf16.mxu0 0
    %183 = vmatpush1.bf16.msra.mxu0 %v162
    %184 = vmatprep.subr.bf16.mxu0 0
    %185 = vmatpush1.bf16.msra.mxu0 %v163
    %186 = vmatprep.subr.bf16.mxu0 0
    %187 = vmatpush1.bf16.msra.mxu0 %v164
    %188 = vmatprep.subr.bf16.mxu0 0
    %189 = vmatpush1.bf16.msra.mxu0 %v165
    %190 = vmatprep.subr.bf16.mxu0 0
    %191 = vmatpush1.bf16.msra.mxu0 0
    %192 = vmatprep.subr.bf16.mxu0 0
    %193 = vmatpush1.bf16.msra.mxu0 0
    %194 = vmatprep.subr.bf16.mxu0 0
    %195 = vmatpush1.bf16.msra.mxu0 0
    %196 = vmatprep.subr.bf16.mxu0 0
    %197 = vmatpush1.bf16.msra.mxu0 0
    %198 = vmatprep.subr.bf16.mxu0 0
    %199 = vmatpush1.bf16.msra.mxu0 0
    %200 = vmatprep.subr.bf16.mxu0 0
    %201 = vmatpush1.bf16.msra.mxu0 0
    %202 = vmatprep.subr.bf16.mxu0 0
    %203 = vmatpush1.bf16.msra.mxu0 0
    %204 = vmatprep.subr.bf16.mxu0 0
    %205 = vmatpush1.bf16.msra.mxu0 0
    %206 = vmatprep.mubr.bf16.mxu0 0
    %207 = vmatmul.mubr.bf16.gmra.mrb[0].mxu0 %v125
    %v208 = vpop.f32.mrb[0].mxu0
    %v209 = vadd.f32 0.0, %v208
    %v210 = vpop.f32.mrb[0].mxu0
    %v211 = vpop.f32.mrb[0].mxu0
    %v212 = vpop.f32.mrb[0].mxu0
    %213 = vdwg.mxu0
    %v215 = vrot.slane %v209, 1
    %v218 = vadd.f32 %v102, %v209
    %v219 = vadd.f32 %v105, %v215
    %v220 = vtanh.pop %v218
    %v221 = vtanh.pop %v219
    %222 = vst [vmem:[#allocation2] sm:$0x1] %v220
    %223 = vst [vmem:[#allocation2 + $0x8] sm:$0x1] %v221
    %v224 = vpack.c.bf16 %v220, %v220
    %v225 = vpack.c.bf16 %v221, %v221
    %v228 = vunpack.c.l.b16 %v224
    %v229 = vunpack.c.l.b16 %v225
    %v230 = vrot.slane %v229, 7
    %vm231 = vcmask 1041409
    %v232 = vsel %vm231, %v230, %v228
    %v233 = vpack.c.b16 %v232, %v232
    %235 = vmatprep.subr.bf16.mxu0 0
    %236 = vmatpush1.bf16.msra.mxu0 %v158
    %237 = vmatprep.subr.bf16.mxu0 0
    %238 = vmatpush1.bf16.msra.mxu0 %v159
    %239 = vmatprep.subr.bf16.mxu0 0
    %240 = vmatpush1.bf16.msra.mxu0 %v160
    %241 = vmatprep.subr.bf16.mxu0 0
    %242 = vmatpush1.bf16.msra.mxu0 %v161
    %243 = vmatprep.subr.bf16.mxu0 0
    %244 = vmatpush1.bf16.msra.mxu0 %v162
    %245 = vmatprep.subr.bf16.mxu0 0
    %246 = vmatpush1.bf16.msra.mxu0 %v163
    %247 = vmatprep.subr.bf16.mxu0 0
    %248 = vmatpush1.bf16.msra.mxu0 %v164
    %249 = vmatprep.subr.bf16.mxu0 0
    %250 = vmatpush1.bf16.msra.mxu0 %v165
    %251 = vmatprep.subr.bf16.mxu0 0
    %252 = vmatpush1.bf16.msra.mxu0 0
    %253 = vmatprep.subr.bf16.mxu0 0
    %254 = vmatpush1.bf16.msra.mxu0 0
    %255 = vmatprep.subr.bf16.mxu0 0
    %256 = vmatpush1.bf16.msra.mxu0 0
    %257 = vmatprep.subr.bf16.mxu0 0
    %258 = vmatpush1.bf16.msra.mxu0 0
    %259 = vmatprep.subr.bf16.mxu0 0
    %260 = vmatpush1.bf16.msra.mxu0 0
    %261 = vmatprep.subr.bf16.mxu0 0
    %262 = vmatpush1.bf16.msra.mxu0 0
    %263 = vmatprep.subr.bf16.mxu0 0
    %264 = vmatpush1.bf16.msra.mxu0 0
    %265 = vmatprep.subr.bf16.mxu0 0
    %266 = vmatpush1.bf16.msra.mxu0 0
    %267 = vmatprep.mubr.bf16.mxu0 0
    %268 = vmatmul.mubr.bf16.gmra.mrb[0].mxu0 %v233
    %v269 = vpop.f32.mrb[0].mxu0
    %v270 = vadd.f32 0.0, %v269
    %v271 = vpop.f32.mrb[0].mxu0
    %v272 = vpop.f32.mrb[0].mxu0
    %v273 = vpop.f32.mrb[0].mxu0
    %274 = vdwg.mxu0
    %v276 = vrot.slane %v270, 7
    %v279 = vadd.f32 %v102, %v276
    %v280 = vadd.f32 %v105, %v270
    %v281 = vtanh.pop %v279
    %v282 = vtanh.pop %v280
    %283 = vst [vmem:[#allocation2] sm:$0x2] %v281
    %284 = vst [vmem:[#allocation2 + $0x8] sm:$0x2] %v282
    %v285 = vpack.c.bf16 %v281, %v281
    %v286 = vpack.c.bf16 %v282, %v282
    %v289 = vunpack.c.l.b16 %v285
    %v290 = vunpack.c.l.b16 %v286
    %v291 = vrot.slane %v289, 1
    %v292 = vsel %vm231, %v290, %v291
    %v293 = vpack.c.b16 %v292, %v292
    %295 = vmatprep.subr.bf16.mxu0 0
    %296 = vmatpush1.bf16.msra.mxu0 %v158
    %297 = vmatprep.subr.bf16.mxu0 0
    %298 = vmatpush1.bf16.msra.mxu0 %v159
    %299 = vmatprep.subr.bf16.mxu0 0
    %300 = vmatpush1.bf16.msra.mxu0 %v160
    %301 = vmatprep.subr.bf16.mxu0 0
    %302 = vmatpush1.bf16.msra.mxu0 %v161
    %303 = vmatprep.subr.bf16.mxu0 0
    %304 = vmatpush1.bf16.msra.mxu0 %v162
    %305 = vmatprep.subr.bf16.mxu0 0
    %306 = vmatpush1.bf16.msra.mxu0 %v163
    %307 = vmatprep.subr.bf16.mxu0 0
    %308 = vmatpush1.bf16.msra.mxu0 %v164
    %309 = vmatprep.subr.bf16.mxu0 0
    %310 = vmatpush1.bf16.msra.mxu0 %v165
    %311 = vmatprep.subr.bf16.mxu0 0
    %312 = vmatpush1.bf16.msra.mxu0 0
    %313 = vmatprep.subr.bf16.mxu0 0
    %314 = vmatpush1.bf16.msra.mxu0 0
    %315 = vmatprep.subr.bf16.mxu0 0
    %316 = vmatpush1.bf16.msra.mxu0 0
    %317 = vmatprep.subr.bf16.mxu0 0
    %318 = vmatpush1.bf16.msra.mxu0 0
    %319 = vmatprep.subr.bf16.mxu0 0
    %320 = vmatpush1.bf16.msra.mxu0 0
    %321 = vmatprep.subr.bf16.mxu0 0
    %322 = vmatpush1.bf16.msra.mxu0 0
    %323 = vmatprep.subr.bf16.mxu0 0
    %324 = vmatpush1.bf16.msra.mxu0 0
    %325 = vmatprep.subr.bf16.mxu0 0
    %326 = vmatpush1.bf16.msra.mxu0 0
    %327 = vmatprep.mubr.bf16.mxu0 0
    %328 = vmatmul.mubr.bf16.gmra.mrb[0].mxu0 %v293
    %v329 = vpop.f32.mrb[0].mxu0
    %v330 = vadd.f32 0.0, %v329
    %v331 = vpop.f32.mrb[0].mxu0
    %v332 = vpop.f32.mrb[0].mxu0
    %v333 = vpop.f32.mrb[0].mxu0
    %334 = vdwg.mxu0
    %v336 = vrot.slane %v330, 6
    %v337 = vrot.slane %v330, 7
    %v340 = vadd.f32 %v102, %v336
    %v341 = vadd.f32 %v105, %v337
    %v342 = vtanh.pop %v340
    %v343 = vtanh.pop %v341
    %344 = vst [vmem:[#allocation2] sm:$0x4] %v342
    %345 = vst [vmem:[#allocation2 + $0x8] sm:$0x4] %v343
    %v346 = vpack.c.bf16 %v342, %v342
    %v347 = vpack.c.bf16 %v343, %v343
    %v350 = vunpack.c.l.b16 %v346
    %v351 = vunpack.c.l.b16 %v347
    %v352 = vrot.slane %v350, 2
    %v353 = vrot.slane %v351, 1
    %v354 = vsel %vm231, %v353, %v352
    %v355 = vpack.c.b16 %v354, %v354
    %357 = vmatprep.subr.bf16.mxu0 0
    %358 = vmatpush1.bf16.msra.mxu0 %v158
    %359 = vmatprep.subr.bf16.mxu0 0
    %360 = vmatpush1.bf16.msra.mxu0 %v159
    %361 = vmatprep.subr.bf16.mxu0 0
    %362 = vmatpush1.bf16.msra.mxu0 %v160
    %363 = vmatprep.subr.bf16.mxu0 0
    %364 = vmatpush1.bf16.msra.mxu0 %v161
    %365 = vmatprep.subr.bf16.mxu0 0
    %366 = vmatpush1.bf16.msra.mxu0 %v162
    %367 = vmatprep.subr.bf16.mxu0 0
    %368 = vmatpush1.bf16.msra.mxu0 %v163
    %369 = vmatprep.subr.bf16.mxu0 0
    %370 = vmatpush1.bf16.msra.mxu0 %v164
    %371 = vmatprep.subr.bf16.mxu0 0
    %372 = vmatpush1.bf16.msra.mxu0 %v165
    %373 = vmatprep.subr.bf16.mxu0 0
    %374 = vmatpush1.bf16.msra.mxu0 0
    %375 = vmatprep.subr.bf16.mxu0 0
    %376 = vmatpush1.bf16.msra.mxu0 0
    %377 = vmatprep.subr.bf16.mxu0 0
    %378 = vmatpush1.bf16.msra.mxu0 0
    %379 = vmatprep.subr.bf16.mxu0 0
    %380 = vmatpush1.bf16.msra.mxu0 0
    %381 = vmatprep.subr.bf16.mxu0 0
    %382 = vmatpush1.bf16.msra.mxu0 0
    %383 = vmatprep.subr.bf16.mxu0 0
    %384 = vmatpush1.bf16.msra.mxu0 0
    %385 = vmatprep.subr.bf16.mxu0 0
    %386 = vmatpush1.bf16.msra.mxu0 0
    %387 = vmatprep.subr.bf16.mxu0 0
    %388 = vmatpush1.bf16.msra.mxu0 0
    %389 = vmatprep.mubr.bf16.mxu0 0
    %390 = vmatmul.mubr.bf16.gmra.mrb[0].mxu0 %v355
    %v391 = vpop.f32.mrb[0].mxu0
    %v392 = vadd.f32 0.0, %v391
    %v393 = vpop.f32.mrb[0].mxu0
    %v394 = vpop.f32.mrb[0].mxu0
    %v395 = vpop.f32.mrb[0].mxu0
    %396 = vdwg.mxu0
    %v398 = vrot.slane %v392, 5
    %v399 = vrot.slane %v392, 6
    %v402 = vadd.f32 %v102, %v398
    %v403 = vadd.f32 %v105, %v399
    %v404 = vtanh.pop %v402
    %v405 = vtanh.pop %v403
    %406 = vst [vmem:[#allocation2] sm:$0x8] %v404
    %407 = vst [vmem:[#allocation2 + $0x8] sm:$0x8] %v405
    %v408 = vpack.c.bf16 %v404, %v404
    %v409 = vpack.c.bf16 %v405, %v405
    %v412 = vunpack.c.l.b16 %v408
    %v413 = vunpack.c.l.b16 %v409
    %v414 = vrot.slane %v412, 3
    %v415 = vrot.slane %v413, 2
    %v416 = vsel %vm231, %v415, %v414
    %v417 = vpack.c.b16 %v416, %v416
    %419 = vmatprep.subr.bf16.mxu0 0
    %420 = vmatpush1.bf16.msra.mxu0 %v158
    %421 = vmatprep.subr.bf16.mxu0 0
    %422 = vmatpush1.bf16.msra.mxu0 %v159
    %423 = vmatprep.subr.bf16.mxu0 0
    %424 = vmatpush1.bf16.msra.mxu0 %v160
    %425 = vmatprep.subr.bf16.mxu0 0
    %426 = vmatpush1.bf16.msra.mxu0 %v161
    %427 = vmatprep.subr.bf16.mxu0 0
    %428 = vmatpush1.bf16.msra.mxu0 %v162
    %429 = vmatprep.subr.bf16.mxu0 0
    %430 = vmatpush1.bf16.msra.mxu0 %v163
    %431 = vmatprep.subr.bf16.mxu0 0
    %432 = vmatpush1.bf16.msra.mxu0 %v164
    %433 = vmatprep.subr.bf16.mxu0 0
    %434 = vmatpush1.bf16.msra.mxu0 %v165
    %435 = vmatprep.subr.bf16.mxu0 0
    %436 = vmatpush1.bf16.msra.mxu0 0
    %437 = vmatprep.subr.bf16.mxu0 0
    %438 = vmatpush1.bf16.msra.mxu0 0
    %439 = vmatprep.subr.bf16.mxu0 0
    %440 = vmatpush1.bf16.msra.mxu0 0
    %441 = vmatprep.subr.bf16.mxu0 0
    %442 = vmatpush1.bf16.msra.mxu0 0
    %443 = vmatprep.subr.bf16.mxu0 0
    %444 = vmatpush1.bf16.msra.mxu0 0
    %445 = vmatprep.subr.bf16.mxu0 0
    %446 = vmatpush1.bf16.msra.mxu0 0
    %447 = vmatprep.subr.bf16.mxu0 0
    %448 = vmatpush1.bf16.msra.mxu0 0
    %449 = vmatprep.subr.bf16.mxu0 0
    %450 = vmatpush1.bf16.msra.mxu0 0
    %451 = vmatprep.mubr.bf16.mxu0 0
    %452 = vmatmul.mubr.bf16.gmra.mrb[0].mxu0 %v417
    %v453 = vpop.f32.mrb[0].mxu0
    %v454 = vadd.f32 0.0, %v453
    %v455 = vpop.f32.mrb[0].mxu0
    %v456 = vpop.f32.mrb[0].mxu0
    %v457 = vpop.f32.mrb[0].mxu0
    %458 = vdwg.mxu0
    %v460 = vrot.slane %v454, 4
    %v461 = vrot.slane %v454, 5
    %v464 = vadd.f32 %v102, %v460
    %v465 = vadd.f32 %v105, %v461
    %v466 = vtanh.pop %v464
    %v467 = vtanh.pop %v465
    %468 = vst [vmem:[#allocation2] sm:$0x10] %v466
    %469 = vst [vmem:[#allocation2 + $0x8] sm:$0x10] %v467
    %v470 = vpack.c.bf16 %v466, %v466
    %v471 = vpack.c.bf16 %v467, %v467
    %v474 = vunpack.c.l.b16 %v470
    %v475 = vunpack.c.l.b16 %v471
    %v476 = vrot.slane %v474, 4
    %v477 = vrot.slane %v475, 3
    %v478 = vsel %vm231, %v477, %v476
    %v479 = vpack.c.b16 %v478, %v478
    %481 = vmatprep.subr.bf16.mxu0 0
    %482 = vmatpush1.bf16.msra.mxu0 %v158
    %483 = vmatprep.subr.bf16.mxu0 0
    %484 = vmatpush1.bf16.msra.mxu0 %v159
    %485 = vmatprep.subr.bf16.mxu0 0
    %486 = vmatpush1.bf16.msra.mxu0 %v160
    %487 = vmatprep.subr.bf16.mxu0 0
    %488 = vmatpush1.bf16.msra.mxu0 %v161
    %489 = vmatprep.subr.bf16.mxu0 0
    %490 = vmatpush1.bf16.msra.mxu0 %v162
    %491 = vmatprep.subr.bf16.mxu0 0
    %492 = vmatpush1.bf16.msra.mxu0 %v163
    %493 = vmatprep.subr.bf16.mxu0 0
    %494 = vmatpush1.bf16.msra.mxu0 %v164
    %495 = vmatprep.subr.bf16.mxu0 0
    %496 = vmatpush1.bf16.msra.mxu0 %v165
    %497 = vmatprep.subr.bf16.mxu0 0
    %498 = vmatpush1.bf16.msra.mxu0 0
    %499 = vmatprep.subr.bf16.mxu0 0
    %500 = vmatpush1.bf16.msra.mxu0 0
    %501 = vmatprep.subr.bf16.mxu0 0
    %502 = vmatpush1.bf16.msra.mxu0 0
    %503 = vmatprep.subr.bf16.mxu0 0
    %504 = vmatpush1.bf16.msra.mxu0 0
    %505 = vmatprep.subr.bf16.mxu0 0
    %506 = vmatpush1.bf16.msra.mxu0 0
    %507 = vmatprep.subr.bf16.mxu0 0
    %508 = vmatpush1.bf16.msra.mxu0 0
    %509 = vmatprep.subr.bf16.mxu0 0
    %510 = vmatpush1.bf16.msra.mxu0 0
    %511 = vmatprep.subr.bf16.mxu0 0
    %512 = vmatpush1.bf16.msra.mxu0 0
    %513 = vmatprep.mubr.bf16.mxu0 0
    %514 = vmatmul.mubr.bf16.gmra.mrb[0].mxu0 %v479
    %v515 = vpop.f32.mrb[0].mxu0
    %v516 = vadd.f32 0.0, %v515
    %v517 = vpop.f32.mrb[0].mxu0
    %v518 = vpop.f32.mrb[0].mxu0
    %v519 = vpop.f32.mrb[0].mxu0
    %520 = vdwg.mxu0
    %v522 = vrot.slane %v516, 3
    %v523 = vrot.slane %v516, 4
    %v526 = vadd.f32 %v102, %v522
    %v527 = vadd.f32 %v105, %v523
    %v528 = vtanh.pop %v526
    %v529 = vtanh.pop %v527
    %530 = vst [vmem:[#allocation2] sm:$0x20] %v528
    %531 = vst [vmem:[#allocation2 + $0x8] sm:$0x20] %v529
    %v532 = vpack.c.bf16 %v528, %v528
    %v533 = vpack.c.bf16 %v529, %v529
    %v536 = vunpack.c.l.b16 %v532
    %v537 = vunpack.c.l.b16 %v533
    %v538 = vrot.slane %v536, 5
    %v539 = vrot.slane %v537, 4
    %v540 = vsel %vm231, %v539, %v538
    %v541 = vpack.c.b16 %v540, %v540
    %543 = vmatprep.subr.bf16.mxu0 0
    %544 = vmatpush1.bf16.msra.mxu0 %v158
    %545 = vmatprep.subr.bf16.mxu0 0
    %546 = vmatpush1.bf16.msra.mxu0 %v159
    %547 = vmatprep.subr.bf16.mxu0 0
    %548 = vmatpush1.bf16.msra.mxu0 %v160
    %549 = vmatprep.subr.bf16.mxu0 0
    %550 = vmatpush1.bf16.msra.mxu0 %v161
    %551 = vmatprep.subr.bf16.mxu0 0
    %552 = vmatpush1.bf16.msra.mxu0 %v162
    %553 = vmatprep.subr.bf16.mxu0 0
    %554 = vmatpush1.bf16.msra.mxu0 %v163
    %555 = vmatprep.subr.bf16.mxu0 0
    %556 = vmatpush1.bf16.msra.mxu0 %v164
    %557 = vmatprep.subr.bf16.mxu0 0
    %558 = vmatpush1.bf16.msra.mxu0 %v165
    %559 = vmatprep.subr.bf16.mxu0 0
    %560 = vmatpush1.bf16.msra.mxu0 0
    %561 = vmatprep.subr.bf16.mxu0 0
    %562 = vmatpush1.bf16.msra.mxu0 0
    %563 = vmatprep.subr.bf16.mxu0 0
    %564 = vmatpush1.bf16.msra.mxu0 0
    %565 = vmatprep.subr.bf16.mxu0 0
    %566 = vmatpush1.bf16.msra.mxu0 0
    %567 = vmatprep.subr.bf16.mxu0 0
    %568 = vmatpush1.bf16.msra.mxu0 0
    %569 = vmatprep.subr.bf16.mxu0 0
    %570 = vmatpush1.bf16.msra.mxu0 0
    %571 = vmatprep.subr.bf16.mxu0 0
    %572 = vmatpush1.bf16.msra.mxu0 0
    %573 = vmatprep.subr.bf16.mxu0 0
    %574 = vmatpush1.bf16.msra.mxu0 0
    %575 = vmatprep.mubr.bf16.mxu0 0
    %576 = vmatmul.mubr.bf16.gmra.mrb[0].mxu0 %v541
    %v577 = vpop.f32.mrb[0].mxu0
    %v578 = vadd.f32 0.0, %v577
    %v579 = vpop.f32.mrb[0].mxu0
    %v580 = vpop.f32.mrb[0].mxu0
    %v581 = vpop.f32.mrb[0].mxu0
    %582 = vdwg.mxu0
    %v584 = vrot.slane %v578, 2
    %v585 = vrot.slane %v578, 3
    %v588 = vadd.f32 %v102, %v584
    %v589 = vadd.f32 %v105, %v585
    %v590 = vtanh.pop %v588
    %v591 = vtanh.pop %v589
    %592 = vst [vmem:[#allocation2] sm:$0x40] %v590
    %593 = vst [vmem:[#allocation2 + $0x8] sm:$0x40] %v591
    %v594 = vpack.c.bf16 %v590, %v590
    %v595 = vpack.c.bf16 %v591, %v591
    %v598 = vunpack.c.l.b16 %v594
    %v599 = vunpack.c.l.b16 %v595
    %v600 = vrot.slane %v598, 6
    %v601 = vrot.slane %v599, 5
    %v602 = vsel %vm231, %v601, %v600
    %v603 = vpack.c.b16 %v602, %v602
    %605 = vmatprep.subr.bf16.mxu0 0
    %606 = vmatpush1.bf16.msra.mxu0 %v158
    %607 = vmatprep.subr.bf16.mxu0 0
    %608 = vmatpush1.bf16.msra.mxu0 %v159
    %609 = vmatprep.subr.bf16.mxu0 0
    %610 = vmatpush1.bf16.msra.mxu0 %v160
    %611 = vmatprep.subr.bf16.mxu0 0
    %612 = vmatpush1.bf16.msra.mxu0 %v161
    %613 = vmatprep.subr.bf16.mxu0 0
    %614 = vmatpush1.bf16.msra.mxu0 %v162
    %615 = vmatprep.subr.bf16.mxu0 0
    %616 = vmatpush1.bf16.msra.mxu0 %v163
    %617 = vmatprep.subr.bf16.mxu0 0
    %618 = vmatpush1.bf16.msra.mxu0 %v164
    %619 = vmatprep.subr.bf16.mxu0 0
    %620 = vmatpush1.bf16.msra.mxu0 %v165
    %621 = vmatprep.subr.bf16.mxu0 0
    %622 = vmatpush1.bf16.msra.mxu0 0
    %623 = vmatprep.subr.bf16.mxu0 0
    %624 = vmatpush1.bf16.msra.mxu0 0
    %625 = vmatprep.subr.bf16.mxu0 0
    %626 = vmatpush1.bf16.msra.mxu0 0
    %627 = vmatprep.subr.bf16.mxu0 0
    %628 = vmatpush1.bf16.msra.mxu0 0
    %629 = vmatprep.subr.bf16.mxu0 0
    %630 = vmatpush1.bf16.msra.mxu0 0
    %631 = vmatprep.subr.bf16.mxu0 0
    %632 = vmatpush1.bf16.msra.mxu0 0
    %633 = vmatprep.subr.bf16.mxu0 0
    %634 = vmatpush1.bf16.msra.mxu0 0
    %635 = vmatprep.subr.bf16.mxu0 0
    %636 = vmatpush1.bf16.msra.mxu0 0
    %637 = vmatprep.mubr.bf16.mxu0 0
    %638 = vmatmul.mubr.bf16.gmra.mrb[0].mxu0 %v603
    %v639 = vpop.f32.mrb[0].mxu0
    %v640 = vadd.f32 0.0, %v639
    %v641 = vpop.f32.mrb[0].mxu0
    %v642 = vpop.f32.mrb[0].mxu0
    %v643 = vpop.f32.mrb[0].mxu0
    %644 = vdwg.mxu0
    %v646 = vrot.slane %v640, 1
    %v647 = vrot.slane %v640, 2
    %v650 = vadd.f32 %v102, %v646
    %v651 = vadd.f32 %v105, %v647
    %v652 = vtanh.pop %v650
    %v653 = vtanh.pop %v651
    %654 = vst [vmem:[#allocation2] sm:$0x80] %v652
    %655 = vst [vmem:[#allocation2 + $0x8] sm:$0x80] %v653
    %v658 = vrot.slane %v653, 7
    %661 = vst [vmem:[#allocation5 - $0x7] sm:$0x80] %v652
    %662 = vst [vmem:[#allocation5 + $0x1] sm:$0x1] %v658
    %v663 = vld [vmem:[#allocation2] sm:$0xff]
    %v664 = vld [vmem:[#allocation2 + $0x8] sm:$0xff]
    %v665 = vpack.c.bf16 %v664, %v663
    %v666 = vld [vmem:[%s5] sm:$0xf]
    %v667 = vld [vmem:[%s5 + $0x4] sm:$0xf]
    %v668 = vld [vmem:[%s5 + $0x8] sm:$0xf]
    %v669 = vld [vmem:[%s5 + $0xc] sm:$0xf]
    %v670 = vld [vmem:[%s5 + $0x10] sm:$0xf]
    %v671 = vld [vmem:[%s5 + $0x14] sm:$0xf]
    %v672 = vld [vmem:[%s5 + $0x18] sm:$0xf]
    %v673 = vld [vmem:[%s5 + $0x1c] sm:$0xf]
    %v674 = vld [vmem:[%s5 + $0x20] sm:$0xf]
    %v675 = vld [vmem:[%s5 + $0x24] sm:$0xf]
    %v676 = vld [vmem:[%s5 + $0x28] sm:$0xf]
    %v677 = vld [vmem:[%s5 + $0x2c] sm:$0xf]
    %v678 = vld [vmem:[%s5 + $0x30] sm:$0xf]
    %v679 = vld [vmem:[%s5 + $0x34] sm:$0xf]
    %v680 = vld [vmem:[%s5 + $0x38] sm:$0xf]
    %v681 = vld [vmem:[%s5 + $0x3c] sm:$0xf]
    %v682 = vld [vmem:[%s6] sm:$0x1]
    %v684 = vlaneseq
    %v685 = vshrl.u32 %v684, 7
    %v686 = vsub.s32 0, %v685
    %v687 = vrot.slane %v682, %v686
    %v705 = vunpack.c.l.b16 %v666
    %v706 = vunpack.c.l.b16 %v667
    %v707 = vunpack.c.l.b16 %v668
    %v708 = vunpack.c.l.b16 %v669
    %v709 = vunpack.c.l.b16 %v670
    %v710 = vunpack.c.l.b16 %v671
    %v711 = vunpack.c.l.b16 %v672
    %v712 = vunpack.c.l.b16 %v673
    %v713 = vunpack.c.l.b16 %v674
    %v714 = vunpack.c.l.b16 %v675
    %v715 = vunpack.c.l.b16 %v676
    %v716 = vunpack.c.l.b16 %v677
    %v717 = vunpack.c.l.b16 %v678
    %v718 = vunpack.c.l.b16 %v679
    %v719 = vunpack.c.l.b16 %v680
    %v720 = vunpack.c.l.b16 %v681
    %v721 = vpack.c.b16 %v706, %v705
    %v722 = vpack.c.b16 %v708, %v707
    %v723 = vpack.c.b16 %v710, %v709
    %v724 = vpack.c.b16 %v712, %v711
    %v725 = vpack.c.b16 %v714, %v713
    %v726 = vpack.c.b16 %v716, %v715
    %v727 = vpack.c.b16 %v718, %v717
    %v728 = vpack.c.b16 %v720, %v719
    %737 = vmatprep.subr.bf16.mxu0 0
    %738 = vmatpush1.bf16.msra.mxu0 %v721
    %739 = vmatprep.subr.bf16.mxu0 0
    %740 = vmatpush1.bf16.msra.mxu0 %v722
    %741 = vmatprep.subr.bf16.mxu0 0
    %742 = vmatpush1.bf16.msra.mxu0 %v723
    %743 = vmatprep.subr.bf16.mxu0 0
    %744 = vmatpush1.bf16.msra.mxu0 %v724
    %745 = vmatprep.subr.bf16.mxu0 0
    %746 = vmatpush1.bf16.msra.mxu0 %v725
    %747 = vmatprep.subr.bf16.mxu0 0
    %748 = vmatpush1.bf16.msra.mxu0 %v726
    %749 = vmatprep.subr.bf16.mxu0 0
    %750 = vmatpush1.bf16.msra.mxu0 %v727
    %751 = vmatprep.subr.bf16.mxu0 0
    %752 = vmatpush1.bf16.msra.mxu0 %v728
    %753 = vmatprep.subr.bf16.mxu0 0
    %754 = vmatpush1.bf16.msra.mxu0 0
    %755 = vmatprep.subr.bf16.mxu0 0
    %756 = vmatpush1.bf16.msra.mxu0 0
    %757 = vmatprep.subr.bf16.mxu0 0
    %758 = vmatpush1.bf16.msra.mxu0 0
    %759 = vmatprep.subr.bf16.mxu0 0
    %760 = vmatpush1.bf16.msra.mxu0 0
    %761 = vmatprep.subr.bf16.mxu0 0
    %762 = vmatpush1.bf16.msra.mxu0 0
    %763 = vmatprep.subr.bf16.mxu0 0
    %764 = vmatpush1.bf16.msra.mxu0 0
    %765 = vmatprep.subr.bf16.mxu0 0
    %766 = vmatpush1.bf16.msra.mxu0 0
    %767 = vmatprep.subr.bf16.mxu0 0
    %768 = vmatpush1.bf16.msra.mxu0 0
    %769 = vmatprep.mubr.bf16.mxu0 0
    %770 = vmatmul.mubr.bf16.gmra.mrb[0].mxu0 %v665
    %v771 = vpop.f32.mrb[0].mxu0
    %v772 = vadd.f32 %v687, %v771
    %v773 = vpop.f32.mrb[0].mxu0
    %v774 = vpop.f32.mrb[0].mxu0
    %v775 = vadd.f32 %v687, %v774
    %v776 = vpop.f32.mrb[0].mxu0
    %777 = vdwg.mxu0
    %778 = vst.msk [vmem:[#allocation3] sm:$0xff] %vm57, %v772
    %779 = vst.msk [vmem:[#allocation3 + $0x8] sm:$0xff] %vm57, %v775
    // Predicated region
    $region30: #{simple_rnn_forward.1} parent=1 // pred_check
      _
    $region31: #{simple_rnn_forward.1} parent=1 // pred_check_branch
      %781 = sbr.rel (0) target = $region33
    $region32: #{simple_rnn_forward.1} parent=1 // pred_region
      %s783 = ssub.s32 256, 256
      %784 = vsyncadd [#allocation4], %s783
      %s785 = sshll.u32 [#allocation3], 4
      %s786 = int_to_ptr.vmem [resolvable:$true] %s785
      %791 = dma.vmem_to_hbm [thread:$0]  %s786, 256, %s7, [#allocation4], 128, 128, 8
    $region33: #{simple_rnn_forward.1} parent=1 // pred_fallthru
      _
    // Predicated region
    $region34: #{simple_rnn_forward.1} parent=1 // pred_check
      _
    $region35: #{simple_rnn_forward.1} parent=1 // pred_check_branch
      %793 = sbr.rel (0) target = $region37
    $region36: #{simple_rnn_forward.1} parent=1 // pred_region
      %s795 = ssub.s32 32, 32
      %796 = vsyncadd [#allocation6], %s795
      %s798 = sshll.u32 [#allocation5], 4
      %s799 = int_to_ptr.vmem [resolvable:$true] %s798
      %801 = dma.vmem_to_hbm [thread:$0]  %s799, 32, %s8, [#allocation6]
    $region37: #{simple_rnn_forward.1} parent=1 // pred_fallthru
      _
    // Predicated region
    $region38: #{simple_rnn_forward.1} parent=1 // pred_check
      _
    $region39: #{simple_rnn_forward.1} parent=1 // pred_check_branch
      %803 = sbr.rel (0) target = $region41
    $region40: #{simple_rnn_forward.1} parent=1 // pred_region
      %804 = dma.done [#allocation4], 256
    $region41: #{simple_rnn_forward.1} parent=1 // pred_fallthru
      _
    // Predicated region
    $region42: #{simple_rnn_forward.1} parent=1 // pred_check
      _
    $region43: #{simple_rnn_forward.1} parent=1 // pred_check_branch
      %806 = sbr.rel (0) target = $region45
    $region44: #{simple_rnn_forward.1} parent=1 // pred_region
      %807 = dma.done [#allocation6], 32
    $region45: #{simple_rnn_forward.1} parent=1 // pred_fallthru
      _
    %808 = vsyncpa [#allocation4], 1
    %809 = vsyncpa [#allocation6], 1

</llo_original>
